<compile_context>
chip_gen: v6e
topology: v6e:2x2x1
jax: 0.10.0
libtpu: 0.0.40
codegen_flags: <defaults>
</compile_context>

<pallas_src>
import functools

import jax
import jax.numpy as jnp
from jax.experimental import pallas as pl
from jax.experimental.pallas import tpu as pltpu


def _round_up(x: int, m: int) -> int:
    return ((x + m - 1) // m) * m


# ----------------------------------------------------------------------------
# Kernel body: one batch tile of the 3-layer MLP + tanh squash.
# ----------------------------------------------------------------------------
def actor_kernel(state_ref, w1_ref, b1_ref, w2_ref, b2_ref, w3_ref, b3_ref,
                 scale_ref, shift_ref, out_ref):
    x = state_ref[...]                                             # [TB, Sp] bf16

    # l1 + ReLU, fused bf16 downcast (only the bf16 activation stays live).
    h1 = jnp.maximum(
        jnp.dot(x, w1_ref[...], preferred_element_type=jnp.float32) + b1_ref[...],
        0.0).astype(jnp.bfloat16)                                  # [TB, 256]

    # l2 + ReLU, fused bf16 downcast.
    h2 = jnp.maximum(
        jnp.dot(h1, w2_ref[...], preferred_element_type=jnp.float32) + b2_ref[...],
        0.0).astype(jnp.bfloat16)                                  # [TB, 256]

    # l3 + tanh squash to [min_action, max_action] (f32 epilogue).
    z = jnp.dot(h2, w3_ref[...], preferred_element_type=jnp.float32) + b3_ref[...]
    out_ref[...] = scale_ref[...] * jnp.tanh(z) + shift_ref[...]   # [TB, Ap] f32


# ----------------------------------------------------------------------------
# One-time parameter preparation (pad to lane-dense shapes, cast to bf16,
# precompute scale/shift).  Call once; reuse the result across forward calls.
# ----------------------------------------------------------------------------
def prepare_params(params, max_action, min_action):
    w1, b1, w2, b2, w3, b3 = params            # w: [in, out], b: [..., out]
    S, H = w1.shape
    A = w3.shape[1]
    Sp = _round_up(S, 128)
    Ap = _round_up(A, 128)

    # Accept scalar or per-dimension action bounds.
    amax = jnp.broadcast_to(jnp.asarray(max_action, jnp.float32).reshape(-1), (A,))
    amax = amax.reshape(1, A)
    amin = jnp.broadcast_to(jnp.asarray(min_action, jnp.float32).reshape(-1), (A,))
    amin = amin.reshape(1, A)

    prepared = (
        jnp.pad(w1, ((0, Sp - S), (0, 0))).astype(jnp.bfloat16),          # w1  [Sp, H]
        jnp.asarray(b1, jnp.float32).reshape(1, H),                        # b1  [1, H]
        jnp.asarray(w2, jnp.bfloat16),                                     # w2  [H, H]
        jnp.asarray(b2, jnp.float32).reshape(1, H),                        # b2  [1, H]
        jnp.pad(w3, ((0, 0), (0, Ap - A))).astype(jnp.bfloat16),           # w3  [H, Ap]
        jnp.pad(jnp.asarray(b3, jnp.float32).reshape(1, A),
                ((0, 0), (0, Ap - A))),                                    # b3  [1, Ap]
        jnp.pad((amax - amin) * 0.5, ((0, 0), (0, Ap - A))),               # scale
        jnp.pad((amax + amin) * 0.5, ((0, 0), (0, Ap - A))),               # shift
    )
    return prepared


def _pick_batch_tile(B: int) -> int:
    if B <= 256:
        # bf16 vregs pack (16, 128): keep the batch tile a multiple of 16.
        return max(16, _round_up(B, 16))
    if B <= 1024:
        # Keep >= 2 grid steps so ("parallel",) engages both v7x TensorCores.
        return 256
    return 512


# ----------------------------------------------------------------------------
# Forward wrapper.  `prepared` comes from prepare_params(); jitted so repeated
# calls only pay the pallas_call + state pad/cast.  For tiny B the call is
# dominated by launch + weight DMA — batch multiple actor invocations into one
# call when possible to amortize it.
# ----------------------------------------------------------------------------
@functools.partial(jax.jit, static_argnames=("action_dim",))
def actor_forward(state, prepared, action_dim):
    """state: [B, state_dim] f32 -> action: [B, action_dim] f32."""
    w1p, b1p, w2p, b2p, w3p, b3p, scale, shift = prepared
    B, S = state.shape
    Sp, H = w1p.shape
    Ap = w3p.shape[1]

    TB = _pick_batch_tile(B)
    Bp = _round_up(B, TB)

    state_p = jnp.pad(state, ((0, Bp - B), (0, Sp - S))).astype(jnp.bfloat16)

    # Constant index_map -> block stays VMEM-resident across grid steps.
    const = lambda shape: pl.BlockSpec(shape, lambda i: (0,) * len(shape))

    grid = (Bp // TB,)
    in_specs = [
        pl.BlockSpec((TB, Sp), lambda i: (i, 0)),   # state: tiled over batch
        const((Sp, H)),                             # w1
        const((1, H)),                              # b1
        const((H, H)),                              # w2
        const((1, H)),                              # b2
        const((H, Ap)),                             # w3
        const((1, Ap)),                             # b3
        const((1, Ap)),                             # scale
        const((1, Ap)),                             # shift
    ]
    out_specs = pl.BlockSpec((TB, Ap), lambda i: (i, 0))

    inputs = (state_p, w1p, b1p, w2p, b2p, w3p, b3p, scale, shift)

    flops = 2 * Bp * (Sp * H + H * H + H * Ap)
    bytes_accessed = sum(int(a.size) * a.dtype.itemsize for a in inputs) \
        + Bp * Ap * 4
    cost = pl.CostEstimate(flops=flops, transcendentals=Bp * Ap,
                           bytes_accessed=bytes_accessed)

    out_p = pl.pallas_call(
        actor_kernel,
        out_shape=jax.ShapeDtypeStruct((Bp, Ap), jnp.float32),
        grid=grid,
        in_specs=in_specs,
        out_specs=out_specs,
        compiler_params=pltpu.CompilerParams(
            dimension_semantics=("parallel",),
            # 32 MiB: enough for TB=512 tiles, still within v7x scoped VMEM.
            vmem_limit_bytes=32 << 20,
        ),
        cost_estimate=cost,
    )(*inputs)

    return out_p[:B, :action_dim]


def init_params(key, state_dim, action_dim, hidden=256):
    """Deterministic PyTorch-style (uniform +-1/sqrt(fan_in)) init, f32."""
    ks = jax.random.split(key, 6)

    def lin(kw, kb, fan_in, fan_out):
        bound = 1.0 / jnp.sqrt(fan_in)
        w = jax.random.uniform(kw, (fan_in, fan_out), jnp.float32, -bound, bound)
        b = jax.random.uniform(kb, (1, fan_out), jnp.float32, -bound, bound)
        return w, b

    w1, b1 = lin(ks[0], ks[1], state_dim, hidden)
    w2, b2 = lin(ks[2], ks[3], hidden, hidden)
    w3, b3 = lin(ks[4], ks[5], hidden, action_dim)
    return (w1, b1, w2, b2, w3, b3)


if __name__ == "__main__":
    key = jax.random.PRNGKey(0)
    k_params, k_state = jax.random.split(key)

    batch = 8
    state_dim = 16
    action_dim = 4

    params = init_params(k_params, state_dim, action_dim)
    state = jax.random.normal(k_state, (batch, state_dim), jnp.float32)
    max_action = jnp.full((action_dim,), 2.0, jnp.float32)
    min_action = jnp.full((action_dim,), -1.0, jnp.float32)

    # One-time prep (pad + bf16 cast + scale/shift); reused across calls.
    prepared = prepare_params(params, max_action, min_action)

    out = actor_forward(state, prepared, action_dim)
    jax.block_until_ready(out)
    assert out.shape == (batch, action_dim)

    # Pure-JAX f32 reference of the same math (kernel uses bf16 matmul inputs
    # with f32 accumulation, so compare with a loosened tolerance).
    w1, b1, w2, b2, w3, b3 = params
    h = jnp.maximum(state @ w1 + b1, 0.0)
    h = jnp.maximum(h @ w2 + b2, 0.0)
    ref = (max_action - min_action) / 2 * jnp.tanh(h @ w3 + b3) \
        + (max_action + min_action) / 2
    assert jnp.allclose(out, ref, atol=5e-2, rtol=5e-2), "mismatch vs reference"

    print("KERNEL_OK")
</pallas_src>

<mosaic_0001>
module attributes {stable_mosaic.version = 11 : i64} {
  func.func @actor_kernel(%arg0: i32, %arg1: memref<16x128xbf16, #tpu.memory_space<vmem>>, %arg2: memref<128x256xbf16, #tpu.memory_space<vmem>>, %arg3: memref<1x256xf32, #tpu.memory_space<vmem>>, %arg4: memref<256x256xbf16, #tpu.memory_space<vmem>>, %arg5: memref<1x256xf32, #tpu.memory_space<vmem>>, %arg6: memref<256x128xbf16, #tpu.memory_space<vmem>>, %arg7: memref<1x128xf32, #tpu.memory_space<vmem>>, %arg8: memref<1x128xf32, #tpu.memory_space<vmem>>, %arg9: memref<1x128xf32, #tpu.memory_space<vmem>>, %arg10: memref<16x128xf32, #tpu.memory_space<vmem>>) attributes {dimension_semantics = [#tpu.dimension_semantics<parallel>], iteration_bounds = array<i64: 1>, scalar_prefetch = 0 : i64, scratch_operands = 0 : i64, tpu.core_type = #tpu.core_type<tc>, window_params = [{transform_indices = @transform_0, window_bounds = array<i64: 16, 128>}, {pipeline_mode = #tpu.pipeline_mode<synchronous>, transform_indices = @transform_1, window_bounds = array<i64: 128, 256>}, {pipeline_mode = #tpu.pipeline_mode<synchronous>, transform_indices = @transform_2, window_bounds = array<i64: 1, 256>}, {pipeline_mode = #tpu.pipeline_mode<synchronous>, transform_indices = @transform_3, window_bounds = array<i64: 256, 256>}, {pipeline_mode = #tpu.pipeline_mode<synchronous>, transform_indices = @transform_4, window_bounds = array<i64: 1, 256>}, {pipeline_mode = #tpu.pipeline_mode<synchronous>, transform_indices = @transform_5, window_bounds = array<i64: 256, 128>}, {pipeline_mode = #tpu.pipeline_mode<synchronous>, transform_indices = @transform_6, window_bounds = array<i64: 1, 128>}, {pipeline_mode = #tpu.pipeline_mode<synchronous>, transform_indices = @transform_7, window_bounds = array<i64: 1, 128>}, {pipeline_mode = #tpu.pipeline_mode<synchronous>, transform_indices = @transform_8, window_bounds = array<i64: 1, 128>}, {transform_indices = @transform_9, window_bounds = array<i64: 16, 128>}]} {
    %c0 = arith.constant 0 : index
    %c0_0 = arith.constant 0 : index
    %0 = vector.load %arg1[%c0, %c0_0] : memref<16x128xbf16, #tpu.memory_space<vmem>>, vector<16x128xbf16>
    %c0_1 = arith.constant 0 : index
    %c0_2 = arith.constant 0 : index
    %1 = vector.load %arg2[%c0_1, %c0_2] : memref<128x256xbf16, #tpu.memory_space<vmem>>, vector<128x256xbf16>
    %cst = arith.constant dense<0.000000e+00> : vector<16x256xf32>
    %2 = tpu.matmul %0, %1, %cst {dimension_numbers = #tpu.dot_dimension_numbers<[1], [0], [0], [1], [0, 0, 1, 1], [], []>} : vector<16x128xbf16>, vector<128x256xbf16>, vector<16x256xf32> -> vector<16x256xf32>
    %c0_3 = arith.constant 0 : index
    %c0_4 = arith.constant 0 : index
    %3 = vector.load %arg3[%c0_3, %c0_4] : memref<1x256xf32, #tpu.memory_space<vmem>>, vector<1x256xf32>
    %4 = vector.broadcast %3 : vector<1x256xf32> to vector<16x256xf32>
    %5 = arith.addf %2, %4 : vector<16x256xf32>
    %cst_5 = arith.constant 0.000000e+00 : f32
    %6 = vector.broadcast %cst_5 : f32 to vector<16x256xf32>
    %7 = arith.maximumf %5, %6 : vector<16x256xf32>
    %8 = arith.truncf %7 : vector<16x256xf32> to vector<16x256xbf16>
    %c0_6 = arith.constant 0 : index
    %c0_7 = arith.constant 0 : index
    %9 = vector.load %arg4[%c0_6, %c0_7] : memref<256x256xbf16, #tpu.memory_space<vmem>>, vector<256x256xbf16>
    %cst_8 = arith.constant dense<0.000000e+00> : vector<16x256xf32>
    %10 = tpu.matmul %8, %9, %cst_8 {dimension_numbers = #tpu.dot_dimension_numbers<[1], [0], [0], [1], [0, 0, 1, 1], [], []>} : vector<16x256xbf16>, vector<256x256xbf16>, vector<16x256xf32> -> vector<16x256xf32>
    %c0_9 = arith.constant 0 : index
    %c0_10 = arith.constant 0 : index
    %11 = vector.load %arg5[%c0_9, %c0_10] : memref<1x256xf32, #tpu.memory_space<vmem>>, vector<1x256xf32>
    %12 = vector.broadcast %11 : vector<1x256xf32> to vector<16x256xf32>
    %13 = arith.addf %10, %12 : vector<16x256xf32>
    %cst_11 = arith.constant 0.000000e+00 : f32
    %14 = vector.broadcast %cst_11 : f32 to vector<16x256xf32>
    %15 = arith.maximumf %13, %14 : vector<16x256xf32>
    %16 = arith.truncf %15 : vector<16x256xf32> to vector<16x256xbf16>
    %c0_12 = arith.constant 0 : index
    %c0_13 = arith.constant 0 : index
    %17 = vector.load %arg6[%c0_12, %c0_13] : memref<256x128xbf16, #tpu.memory_space<vmem>>, vector<256x128xbf16>
    %cst_14 = arith.constant dense<0.000000e+00> : vector<16x128xf32>
    %18 = tpu.matmul %16, %17, %cst_14 {dimension_numbers = #tpu.dot_dimension_numbers<[1], [0], [0], [1], [0, 0, 1, 1], [], []>} : vector<16x256xbf16>, vector<256x128xbf16>, vector<16x128xf32> -> vector<16x128xf32>
    %c0_15 = arith.constant 0 : index
    %c0_16 = arith.constant 0 : index
    %19 = vector.load %arg7[%c0_15, %c0_16] : memref<1x128xf32, #tpu.memory_space<vmem>>, vector<1x128xf32>
    %20 = vector.broadcast %19 : vector<1x128xf32> to vector<16x128xf32>
    %21 = arith.addf %18, %20 : vector<16x128xf32>
    %c0_17 = arith.constant 0 : index
    %c0_18 = arith.constant 0 : index
    %22 = vector.load %arg8[%c0_17, %c0_18] : memref<1x128xf32, #tpu.memory_space<vmem>>, vector<1x128xf32>
    %23 = math.tanh %21 : vector<16x128xf32>
    %24 = vector.broadcast %22 : vector<1x128xf32> to vector<16x128xf32>
    %25 = arith.mulf %24, %23 : vector<16x128xf32>
    %c0_19 = arith.constant 0 : index
    %c0_20 = arith.constant 0 : index
    %26 = vector.load %arg9[%c0_19, %c0_20] : memref<1x128xf32, #tpu.memory_space<vmem>>, vector<1x128xf32>
    %27 = vector.broadcast %26 : vector<1x128xf32> to vector<16x128xf32>
    %28 = arith.addf %25, %27 : vector<16x128xf32>
    %c0_21 = arith.constant 0 : index
    %c0_22 = arith.constant 0 : index
    %29 = vector.load %arg10[%c0_21, %c0_22] : memref<16x128xf32, #tpu.memory_space<vmem>>, vector<16x128xf32>
    tpu.vector_store %arg10[%c0_21, %c0_22], %28 {strides = array<i32>} : memref<16x128xf32, #tpu.memory_space<vmem>>, vector<16x128xf32>,
    return
  }
  func.func @transform_0(%arg0: i32) -> (i32, i32) {
    %c0_i32 = arith.constant 0 : i32
    %c0_i32_0 = arith.constant 0 : i32
    return %arg0, %c0_i32 : i32, i32
  }
  func.func @transform_1(%arg0: i32) -> (i32, i32) {
    %c0_i32 = arith.constant 0 : i32
    %c0_i32_0 = arith.constant 0 : i32
    %c0_i32_1 = arith.constant 0 : i32
    return %c0_i32, %c0_i32_0 : i32, i32
  }
  func.func @transform_2(%arg0: i32) -> (i32, i32) {
    %c0_i32 = arith.constant 0 : i32
    %c0_i32_0 = arith.constant 0 : i32
    %c0_i32_1 = arith.constant 0 : i32
    return %c0_i32, %c0_i32_0 : i32, i32
  }
  func.func @transform_3(%arg0: i32) -> (i32, i32) {
    %c0_i32 = arith.constant 0 : i32
    %c0_i32_0 = arith.constant 0 : i32
    %c0_i32_1 = arith.constant 0 : i32
    return %c0_i32, %c0_i32_0 : i32, i32
  }
  func.func @transform_4(%arg0: i32) -> (i32, i32) {
    %c0_i32 = arith.constant 0 : i32
    %c0_i32_0 = arith.constant 0 : i32
    %c0_i32_1 = arith.constant 0 : i32
    return %c0_i32, %c0_i32_0 : i32, i32
  }
  func.func @transform_5(%arg0: i32) -> (i32, i32) {
    %c0_i32 = arith.constant 0 : i32
    %c0_i32_0 = arith.constant 0 : i32
    %c0_i32_1 = arith.constant 0 : i32
    return %c0_i32, %c0_i32_0 : i32, i32
  }
  func.func @transform_6(%arg0: i32) -> (i32, i32) {
    %c0_i32 = arith.constant 0 : i32
    %c0_i32_0 = arith.constant 0 : i32
    %c0_i32_1 = arith.constant 0 : i32
    return %c0_i32, %c0_i32_0 : i32, i32
  }
  func.func @transform_7(%arg0: i32) -> (i32, i32) {
    %c0_i32 = arith.constant 0 : i32
    %c0_i32_0 = arith.constant 0 : i32
    %c0_i32_1 = arith.constant 0 : i32
    return %c0_i32, %c0_i32_0 : i32, i32
  }
  func.func @transform_8(%arg0: i32) -> (i32, i32) {
    %c0_i32 = arith.constant 0 : i32
    %c0_i32_0 = arith.constant 0 : i32
    %c0_i32_1 = arith.constant 0 : i32
    return %c0_i32, %c0_i32_0 : i32, i32
  }
  func.func @transform_9(%arg0: i32) -> (i32, i32) {
    %c0_i32 = arith.constant 0 : i32
    %c0_i32_0 = arith.constant 0 : i32
    return %arg0, %c0_i32 : i32, i32
  }
}

</mosaic_0001>

<llo_original>
// kernel: actor_forward.1
$region0: #{actor_forward.1}
  #allocation0 [shape = 'u32[]', space=smem, size = 0x4, offset = 0x4, fixed_abs, tag = 'smem constant byte address 0x4 - core index']
  #allocation1 [shape = 'u32[144,128]{1,0:T(1,128)}', space=vmem, size = 0x12000, scoped, tag = 'internal scratch']
  %s0 = inlined_call_operand.vmem [shape: bf16[16,128], index: 0, kind: input, shape index: {}]
  %s1 = inlined_call_operand.hbm [shape: bf16[128,256], index: 1, kind: input, shape index: {}]
  %s2 = inlined_call_operand.vmem [shape: f32[1,256], index: 2, kind: input, shape index: {}]
  %s3 = inlined_call_operand.hbm [shape: bf16[256,256], index: 3, kind: input, shape index: {}]
  %s4 = inlined_call_operand.vmem [shape: f32[1,256], index: 4, kind: input, shape index: {}]
  %s5 = inlined_call_operand.hbm [shape: bf16[256,128], index: 5, kind: input, shape index: {}]
  %s6 = inlined_call_operand.vmem [shape: f32[1,128], index: 6, kind: input, shape index: {}]
  %s7 = inlined_call_operand.vmem [shape: f32[1,128], index: 7, kind: input, shape index: {}]
  %s8 = inlined_call_operand.vmem [shape: f32[1,128], index: 8, kind: input, shape index: {}]
  %s9 = inlined_call_operand.vmem [shape: f32[16,128], index: 9, kind: output, shape index: {}]
  %s10 = sld [smem:[#allocation0]]
  $region58: #{actor_forward.1} parent=0
    _
  %s12 = ssub.s32 1, %s10
  %s13 = scalar_select 0, %s12, %s10
  $region1: #{actor_forward.1} parent=0
    #allocation2 [shape = 'u8[65536]{0}', space=vmem, size = 0x10000, scoped, tag = 'input window, operand 1, single buffered']
    #allocation3 [shape = 's32[1]{0}', space=sflag, size = 0x4, scoped, tag = 'scoped memory for actor_forward.1']
    #allocation4 [shape = 'u8[131072]{0}', space=vmem, size = 0x20000, scoped, tag = 'input window, operand 3, single buffered']
    #allocation5 [shape = 's32[1]{0}', space=sflag, size = 0x4, scoped, tag = 'scoped memory for actor_forward.1']
    #allocation6 [shape = 'u8[65536]{0}', space=vmem, size = 0x10000, scoped, tag = 'input window, operand 5, single buffered']
    %14 = vsyncpa [#allocation3], 0
    %15 = vsyncpa [#allocation5], 0
    // Predicated region
    $region2: #{actor_forward.1} parent=1 // pred_check
      _
    $region3: #{actor_forward.1} parent=1 // pred_check_branch
      %17 = sbr.rel (0) target = $region5
    $region4: #{actor_forward.1} parent=1 // pred_region
      _
    $region5: #{actor_forward.1} parent=1 // pred_fallthru
      _
    // Predicated region
    $region6: #{actor_forward.1} parent=1 // pred_check
      _
    $region7: #{actor_forward.1} parent=1 // pred_check_branch
      %19 = sbr.rel (0) target = $region9
    $region8: #{actor_forward.1} parent=1 // pred_region
      %s21 = ssub.s32 2048, 2048
      %22 = vsyncadd [#allocation3], %s21
      %s23 = sshll.u32 [#allocation2], 4
      %s24 = int_to_ptr.vmem [resolvable:$true] %s23
      %29 = dma.hbm_to_vmem [thread:$0]  %s1, 2048, %s24, [#allocation3], 128, 128, 8
    $region9: #{actor_forward.1} parent=1 // pred_fallthru
      _
    // Predicated region
    $region10: #{actor_forward.1} parent=1 // pred_check
      _
    $region11: #{actor_forward.1} parent=1 // pred_check_branch
      %31 = sbr.rel (0) target = $region13
    $region12: #{actor_forward.1} parent=1 // pred_region
      _
    $region13: #{actor_forward.1} parent=1 // pred_fallthru
      _
    // Predicated region
    $region14: #{actor_forward.1} parent=1 // pred_check
      _
    $region15: #{actor_forward.1} parent=1 // pred_check_branch
      %33 = sbr.rel (0) target = $region17
    $region16: #{actor_forward.1} parent=1 // pred_region
      %s35 = ssub.s32 4096, 4096
      %36 = vsyncadd [#allocation5], %s35
      %s37 = sshll.u32 [#allocation4], 4
      %s38 = int_to_ptr.vmem [resolvable:$true] %s37
      %43 = dma.hbm_to_vmem [thread:$0]  %s3, 4096, %s38, [#allocation5], 128, 128, 8
    $region17: #{actor_forward.1} parent=1 // pred_fallthru
      _
    // Predicated region
    $region18: #{actor_forward.1} parent=1 // pred_check
      _
    $region19: #{actor_forward.1} parent=1 // pred_check_branch
      %45 = sbr.rel (0) target = $region21
    $region20: #{actor_forward.1} parent=1 // pred_region
      _
    $region21: #{actor_forward.1} parent=1 // pred_fallthru
      _
    // Predicated region
    $region22: #{actor_forward.1} parent=1 // pred_check
      _
    $region23: #{actor_forward.1} parent=1 // pred_check_branch
      %47 = sbr.rel (0) target = $region25
    $region24: #{actor_forward.1} parent=1 // pred_region
      %s49 = ssub.s32 2048, 2048
      %50 = vsyncadd [#allocation5], %s49
      %s51 = sshll.u32 [#allocation6], 4
      %s52 = int_to_ptr.vmem [resolvable:$true] %s51
      %57 = dma.hbm_to_vmem [thread:$0]  %s5, 2048, %s52, [#allocation5], 64, 64, 4
    $region25: #{actor_forward.1} parent=1 // pred_fallthru
      _
    // Predicated region
    $region26: #{actor_forward.1} parent=1 // pred_check
      _
    $region27: #{actor_forward.1} parent=1 // pred_check_branch
      %59 = sbr.rel (0) target = $region29
    $region28: #{actor_forward.1} parent=1 // pred_region
      _
    $region29: #{actor_forward.1} parent=1 // pred_fallthru
      _
    // Predicated region
    $region30: #{actor_forward.1} parent=1 // pred_check
      _
    $region31: #{actor_forward.1} parent=1 // pred_check_branch
      %61 = sbr.rel (0) target = $region33
    $region32: #{actor_forward.1} parent=1 // pred_region
      _
    $region33: #{actor_forward.1} parent=1 // pred_fallthru
      _
    // Predicated region
    $region34: #{actor_forward.1} parent=1 // pred_check
      _
    $region35: #{actor_forward.1} parent=1 // pred_check_branch
      %63 = sbr.rel (0) target = $region37
    $region36: #{actor_forward.1} parent=1 // pred_region
      _
    $region37: #{actor_forward.1} parent=1 // pred_fallthru
      _
    // Predicated region
    $region38: #{actor_forward.1} parent=1 // pred_check
      _
    $region39: #{actor_forward.1} parent=1 // pred_check_branch
      %65 = sbr.rel (0) target = $region41
    $region40: #{actor_forward.1} parent=1 // pred_region
      %66 = dma.done [#allocation3], 2048
    $region41: #{actor_forward.1} parent=1 // pred_fallthru
      _
    // Predicated region
    $region42: #{actor_forward.1} parent=1 // pred_check
      _
    $region43: #{actor_forward.1} parent=1 // pred_check_branch
      %68 = sbr.rel (0) target = $region45
    $region44: #{actor_forward.1} parent=1 // pred_region
      %69 = dma.done [#allocation5], 4096
    $region45: #{actor_forward.1} parent=1 // pred_fallthru
      _
    // Predicated region
    $region46: #{actor_forward.1} parent=1 // pred_check
      _
    $region47: #{actor_forward.1} parent=1 // pred_check_branch
      %71 = sbr.rel (0) target = $region49
    $region48: #{actor_forward.1} parent=1 // pred_region
      %72 = dma.done [#allocation5], 2048
    $region49: #{actor_forward.1} parent=1 // pred_fallthru
      _
    %v74 = vld [vmem:[%s0] sm:$0xf]
    %v75 = vld [vmem:[%s0 + $0x4] sm:$0xf]
    %v76 = vld [vmem:[#allocation2] sm:$0xff]
    %v77 = vld [vmem:[#allocation2 + $0x8] sm:$0xff]
    %v78 = vld [vmem:[#allocation2 + $0x10] sm:$0xff]
    %v79 = vld [vmem:[#allocation2 + $0x18] sm:$0xff]
    %v80 = vld [vmem:[#allocation2 + $0x20] sm:$0xff]
    %v81 = vld [vmem:[#allocation2 + $0x28] sm:$0xff]
    %v82 = vld [vmem:[#allocation2 + $0x30] sm:$0xff]
    %v83 = vld [vmem:[#allocation2 + $0x38] sm:$0xff]
    %v84 = vld [vmem:[#allocation2 + $0x40] sm:$0xff]
    %v85 = vld [vmem:[#allocation2 + $0x48] sm:$0xff]
    %v86 = vld [vmem:[#allocation2 + $0x50] sm:$0xff]
    %v87 = vld [vmem:[#allocation2 + $0x58] sm:$0xff]
    %v88 = vld [vmem:[#allocation2 + $0x60] sm:$0xff]
    %v89 = vld [vmem:[#allocation2 + $0x68] sm:$0xff]
    %v90 = vld [vmem:[#allocation2 + $0x70] sm:$0xff]
    %v91 = vld [vmem:[#allocation2 + $0x78] sm:$0xff]
    %v92 = vld [vmem:[%s2] sm:$0x3]
    %v94 = vlaneseq
    %v95 = vshrl.u32 %v94, 7
    %v96 = vsub.s32 0, %v95
    %v97 = vrot.slane %v92, %v96
    %v98 = vlaneseq
    %v99 = vshrl.u32 %v98, 7
    %v100 = vsub.s32 1, %v99
    %v101 = vrot.slane %v92, %v100
    %v106 = vunpack.c.l.b16 %v74
    %v107 = vunpack.c.l.b16 %v75
    %v108 = vpack.c.b16 %v107, %v106
    %v126 = vunpack.c.l.b16 %v76
    %v127 = vunpack.c.h.b16 %v76
    %v128 = vunpack.c.l.b16 %v77
    %v129 = vunpack.c.h.b16 %v77
    %v130 = vunpack.c.l.b16 %v78
    %v131 = vunpack.c.h.b16 %v78
    %v132 = vunpack.c.l.b16 %v79
    %v133 = vunpack.c.h.b16 %v79
    %v134 = vunpack.c.l.b16 %v80
    %v135 = vunpack.c.h.b16 %v80
    %v136 = vunpack.c.l.b16 %v81
    %v137 = vunpack.c.h.b16 %v81
    %v138 = vunpack.c.l.b16 %v82
    %v139 = vunpack.c.h.b16 %v82
    %v140 = vunpack.c.l.b16 %v83
    %v141 = vunpack.c.h.b16 %v83
    %v142 = vunpack.c.l.b16 %v84
    %v143 = vunpack.c.h.b16 %v84
    %v144 = vunpack.c.l.b16 %v85
    %v145 = vunpack.c.h.b16 %v85
    %v146 = vunpack.c.l.b16 %v86
    %v147 = vunpack.c.h.b16 %v86
    %v148 = vunpack.c.l.b16 %v87
    %v149 = vunpack.c.h.b16 %v87
    %v150 = vunpack.c.l.b16 %v88
    %v151 = vunpack.c.h.b16 %v88
    %v152 = vunpack.c.l.b16 %v89
    %v153 = vunpack.c.h.b16 %v89
    %v154 = vunpack.c.l.b16 %v90
    %v155 = vunpack.c.h.b16 %v90
    %v156 = vunpack.c.l.b16 %v91
    %v157 = vunpack.c.h.b16 %v91
    %v158 = vpack.c.b16 %v128, %v126
    %v159 = vpack.c.b16 %v129, %v127
    %v160 = vpack.c.b16 %v132, %v130
    %v161 = vpack.c.b16 %v133, %v131
    %v162 = vpack.c.b16 %v136, %v134
    %v163 = vpack.c.b16 %v137, %v135
    %v164 = vpack.c.b16 %v140, %v138
    %v165 = vpack.c.b16 %v141, %v139
    %v166 = vpack.c.b16 %v144, %v142
    %v167 = vpack.c.b16 %v145, %v143
    %v168 = vpack.c.b16 %v148, %v146
    %v169 = vpack.c.b16 %v149, %v147
    %v170 = vpack.c.b16 %v152, %v150
    %v171 = vpack.c.b16 %v153, %v151
    %v172 = vpack.c.b16 %v156, %v154
    %v173 = vpack.c.b16 %v157, %v155
    %190 = vmatprep.subr.bf16.mxu0 %v173
    %191 = vmatpush1.bf16.msra.mxu0 %v172
    %192 = vmatprep.subr.bf16.mxu0 %v171
    %193 = vmatpush1.bf16.msra.mxu0 %v170
    %194 = vmatprep.subr.bf16.mxu0 %v169
    %195 = vmatpush1.bf16.msra.mxu0 %v168
    %196 = vmatprep.subr.bf16.mxu0 %v167
    %197 = vmatpush1.bf16.msra.mxu0 %v166
    %198 = vmatprep.subr.bf16.mxu0 %v165
    %199 = vmatpush1.bf16.msra.mxu0 %v164
    %200 = vmatprep.subr.bf16.mxu0 %v163
    %201 = vmatpush1.bf16.msra.mxu0 %v162
    %202 = vmatprep.subr.bf16.mxu0 %v161
    %203 = vmatpush1.bf16.msra.mxu0 %v160
    %204 = vmatprep.subr.bf16.mxu0 %v159
    %205 = vmatpush1.bf16.msra.mxu0 %v158
    %206 = vmatprep.subr.bf16.mxu0 0
    %207 = vmatpush2.bf16.msra.mxu0 0
    %208 = vmatprep.subr.bf16.mxu0 0
    %209 = vmatpush2.bf16.msra.mxu0 0
    %210 = vmatprep.subr.bf16.mxu0 0
    %211 = vmatpush2.bf16.msra.mxu0 0
    %212 = vmatprep.subr.bf16.mxu0 0
    %213 = vmatpush2.bf16.msra.mxu0 0
    %214 = vmatprep.subr.bf16.mxu0 0
    %215 = vmatpush2.bf16.msra.mxu0 0
    %216 = vmatprep.subr.bf16.mxu0 0
    %217 = vmatpush2.bf16.msra.mxu0 0
    %218 = vmatprep.subr.bf16.mxu0 0
    %219 = vmatpush2.bf16.msra.mxu0 0
    %220 = vmatprep.subr.bf16.mxu0 0
    %221 = vmatpush2.bf16.msra.mxu0 0
    %222 = vmatprep.mubr.bf16.mxu0 0
    %223 = vmatmul.mubr.bf16.gmra.mxu0 %v108
    %v224 = vpop.f32.mrf.mxu0
    %v225 = vadd.f32 %v97, %v224
    %v226 = vpop.f32.mrf.mxu0
    %v227 = vadd.f32 %v101, %v226
    %v228 = vpop.f32.mrf.mxu0
    %v229 = vadd.f32 %v97, %v228
    %v230 = vpop.f32.mrf.mxu0
    %v231 = vadd.f32 %v101, %v230
    %232 = vdwg.mxu0
    %v233 = vmax.f32 %v225, 0.0
    %v234 = vmax.f32 %v227, 0.0
    %v235 = vmax.f32 %v229, 0.0
    %v236 = vmax.f32 %v231, 0.0
    %v237 = vpack.c.bf16 %v235, %v233
    %v238 = vpack.c.bf16 %v236, %v234
    %v239 = vld [vmem:[#allocation4] sm:$0xff]
    %v240 = vld [vmem:[#allocation4 + $0x8] sm:$0xff]
    %v241 = vld [vmem:[#allocation4 + $0x10] sm:$0xff]
    %v242 = vld [vmem:[#allocation4 + $0x18] sm:$0xff]
    %v243 = vld [vmem:[#allocation4 + $0x20] sm:$0xff]
    %v244 = vld [vmem:[#allocation4 + $0x28] sm:$0xff]
    %v245 = vld [vmem:[#allocation4 + $0x30] sm:$0xff]
    %v246 = vld [vmem:[#allocation4 + $0x38] sm:$0xff]
    %v247 = vld [vmem:[#allocation4 + $0x40] sm:$0xff]
    %v248 = vld [vmem:[#allocation4 + $0x48] sm:$0xff]
    %v249 = vld [vmem:[#allocation4 + $0x50] sm:$0xff]
    %v250 = vld [vmem:[#allocation4 + $0x58] sm:$0xff]
    %v251 = vld [vmem:[#allocation4 + $0x60] sm:$0xff]
    %v252 = vld [vmem:[#allocation4 + $0x68] sm:$0xff]
    %v253 = vld [vmem:[#allocation4 + $0x70] sm:$0xff]
    %v254 = vld [vmem:[#allocation4 + $0x78] sm:$0xff]
    %v255 = vld [vmem:[#allocation4 + $0x80] sm:$0xff]
    %v256 = vld [vmem:[#allocation4 + $0x88] sm:$0xff]
    %v257 = vld [vmem:[#allocation4 + $0x90] sm:$0xff]
    %v258 = vld [vmem:[#allocation4 + $0x98] sm:$0xff]
    %v259 = vld [vmem:[#allocation4 + $0xa0] sm:$0xff]
    %v260 = vld [vmem:[#allocation4 + $0xa8] sm:$0xff]
    %v261 = vld [vmem:[#allocation4 + $0xb0] sm:$0xff]
    %v262 = vld [vmem:[#allocation4 + $0xb8] sm:$0xff]
    %v263 = vld [vmem:[#allocation4 + $0xc0] sm:$0xff]
    %v264 = vld [vmem:[#allocation4 + $0xc8] sm:$0xff]
    %v265 = vld [vmem:[#allocation4 + $0xd0] sm:$0xff]
    %v266 = vld [vmem:[#allocation4 + $0xd8] sm:$0xff]
    %v267 = vld [vmem:[#allocation4 + $0xe0] sm:$0xff]
    %v268 = vld [vmem:[#allocation4 + $0xe8] sm:$0xff]
    %v269 = vld [vmem:[#allocation4 + $0xf0] sm:$0xff]
    %v270 = vld [vmem:[#allocation4 + $0xf8] sm:$0xff]
    %v271 = vld [vmem:[%s4] sm:$0x3]
    %v273 = vlaneseq
    %v274 = vshrl.u32 %v273, 7
    %v275 = vsub.s32 0, %v274
    %v276 = vrot.slane %v271, %v275
    %v277 = vlaneseq
    %v278 = vshrl.u32 %v277, 7
    %v279 = vsub.s32 1, %v278
    %v280 = vrot.slane %v271, %v279
    %v315 = vunpack.c.l.b16 %v239
    %v316 = vunpack.c.h.b16 %v239
    %v317 = vunpack.c.l.b16 %v240
    %v318 = vunpack.c.h.b16 %v240
    %v319 = vunpack.c.l.b16 %v241
    %v320 = vunpack.c.h.b16 %v241
    %v321 = vunpack.c.l.b16 %v242
    %v322 = vunpack.c.h.b16 %v242
    %v323 = vunpack.c.l.b16 %v243
    %v324 = vunpack.c.h.b16 %v243
    %v325 = vunpack.c.l.b16 %v244
    %v326 = vunpack.c.h.b16 %v244
    %v327 = vunpack.c.l.b16 %v245
    %v328 = vunpack.c.h.b16 %v245
    %v329 = vunpack.c.l.b16 %v246
    %v330 = vunpack.c.h.b16 %v246
    %v331 = vunpack.c.l.b16 %v247
    %v332 = vunpack.c.h.b16 %v247
    %v333 = vunpack.c.l.b16 %v248
    %v334 = vunpack.c.h.b16 %v248
    %v335 = vunpack.c.l.b16 %v249
    %v336 = vunpack.c.h.b16 %v249
    %v337 = vunpack.c.l.b16 %v250
    %v338 = vunpack.c.h.b16 %v250
    %v339 = vunpack.c.l.b16 %v251
    %v340 = vunpack.c.h.b16 %v251
    %v341 = vunpack.c.l.b16 %v252
    %v342 = vunpack.c.h.b16 %v252
    %v343 = vunpack.c.l.b16 %v253
    %v344 = vunpack.c.h.b16 %v253
    %v345 = vunpack.c.l.b16 %v254
    %v346 = vunpack.c.h.b16 %v254
    %v347 = vunpack.c.l.b16 %v255
    %v348 = vunpack.c.h.b16 %v255
    %v349 = vunpack.c.l.b16 %v256
    %v350 = vunpack.c.h.b16 %v256
    %v351 = vunpack.c.l.b16 %v257
    %v352 = vunpack.c.h.b16 %v257
    %v353 = vunpack.c.l.b16 %v258
    %v354 = vunpack.c.h.b16 %v258
    %v355 = vunpack.c.l.b16 %v259
    %v356 = vunpack.c.h.b16 %v259
    %v357 = vunpack.c.l.b16 %v260
    %v358 = vunpack.c.h.b16 %v260
    %v359 = vunpack.c.l.b16 %v261
    %v360 = vunpack.c.h.b16 %v261
    %v361 = vunpack.c.l.b16 %v262
    %v362 = vunpack.c.h.b16 %v262
    %v363 = vunpack.c.l.b16 %v263
    %v364 = vunpack.c.h.b16 %v263
    %v365 = vunpack.c.l.b16 %v264
    %v366 = vunpack.c.h.b16 %v264
    %v367 = vunpack.c.l.b16 %v265
    %v368 = vunpack.c.h.b16 %v265
    %v369 = vunpack.c.l.b16 %v266
    %v370 = vunpack.c.h.b16 %v266
    %v371 = vunpack.c.l.b16 %v267
    %v372 = vunpack.c.h.b16 %v267
    %v373 = vunpack.c.l.b16 %v268
    %v374 = vunpack.c.h.b16 %v268
    %v375 = vunpack.c.l.b16 %v269
    %v376 = vunpack.c.h.b16 %v269
    %v377 = vunpack.c.l.b16 %v270
    %v378 = vunpack.c.h.b16 %v270
    %v379 = vpack.c.b16 %v317, %v315
    %v380 = vpack.c.b16 %v318, %v316
    %v381 = vpack.c.b16 %v321, %v319
    %v382 = vpack.c.b16 %v322, %v320
    %v383 = vpack.c.b16 %v325, %v323
    %v384 = vpack.c.b16 %v326, %v324
    %v385 = vpack.c.b16 %v329, %v327
    %v386 = vpack.c.b16 %v330, %v328
    %v387 = vpack.c.b16 %v333, %v331
    %v388 = vpack.c.b16 %v334, %v332
    %v389 = vpack.c.b16 %v337, %v335
    %v390 = vpack.c.b16 %v338, %v336
    %v391 = vpack.c.b16 %v341, %v339
    %v392 = vpack.c.b16 %v342, %v340
    %v393 = vpack.c.b16 %v345, %v343
    %v394 = vpack.c.b16 %v346, %v344
    %v395 = vpack.c.b16 %v349, %v347
    %v396 = vpack.c.b16 %v350, %v348
    %v397 = vpack.c.b16 %v353, %v351
    %v398 = vpack.c.b16 %v354, %v352
    %v399 = vpack.c.b16 %v357, %v355
    %v400 = vpack.c.b16 %v358, %v356
    %v401 = vpack.c.b16 %v361, %v359
    %v402 = vpack.c.b16 %v362, %v360
    %v403 = vpack.c.b16 %v365, %v363
    %v404 = vpack.c.b16 %v366, %v364
    %v405 = vpack.c.b16 %v369, %v367
    %v406 = vpack.c.b16 %v370, %v368
    %v407 = vpack.c.b16 %v373, %v371
    %v408 = vpack.c.b16 %v374, %v372
    %v409 = vpack.c.b16 %v377, %v375
    %v410 = vpack.c.b16 %v378, %v376
    %443 = vmatprep.subr.bf16.mxu0 %v394
    %444 = vmatpush1.bf16.msra.mxu0 %v393
    %445 = vmatprep.subr.bf16.mxu0 %v392
    %446 = vmatpush1.bf16.msra.mxu0 %v391
    %447 = vmatprep.subr.bf16.mxu0 %v390
    %448 = vmatpush1.bf16.msra.mxu0 %v389
    %449 = vmatprep.subr.bf16.mxu0 %v388
    %450 = vmatpush1.bf16.msra.mxu0 %v387
    %451 = vmatprep.subr.bf16.mxu0 %v386
    %452 = vmatpush1.bf16.msra.mxu0 %v385
    %453 = vmatprep.subr.bf16.mxu0 %v384
    %454 = vmatpush1.bf16.msra.mxu0 %v383
    %455 = vmatprep.subr.bf16.mxu0 %v382
    %456 = vmatpush1.bf16.msra.mxu0 %v381
    %457 = vmatprep.subr.bf16.mxu0 %v380
    %458 = vmatpush1.bf16.msra.mxu0 %v379
    %459 = vmatprep.subr.bf16.mxu0 %v410
    %460 = vmatpush2.bf16.msra.mxu0 %v409
    %461 = vmatprep.subr.bf16.mxu0 %v408
    %462 = vmatpush2.bf16.msra.mxu0 %v407
    %463 = vmatprep.subr.bf16.mxu0 %v406
    %464 = vmatpush2.bf16.msra.mxu0 %v405
    %465 = vmatprep.subr.bf16.mxu0 %v404
    %466 = vmatpush2.bf16.msra.mxu0 %v403
    %467 = vmatprep.subr.bf16.mxu0 %v402
    %468 = vmatpush2.bf16.msra.mxu0 %v401
    %469 = vmatprep.subr.bf16.mxu0 %v400
    %470 = vmatpush2.bf16.msra.mxu0 %v399
    %471 = vmatprep.subr.bf16.mxu0 %v398
    %472 = vmatpush2.bf16.msra.mxu0 %v397
    %473 = vmatprep.subr.bf16.mxu0 %v396
    %474 = vmatpush2.bf16.msra.mxu0 %v395
    %475 = vmatprep.mubr.bf16.mxu0 %v238
    %476 = vmatmul.mubr.bf16.gmra.mxu0 %v237
    %v477 = vpop.f32.mrf.mxu0
    %v478 = vadd.f32 %v276, %v477
    %v479 = vpop.f32.mrf.mxu0
    %v480 = vadd.f32 %v280, %v479
    %v481 = vpop.f32.mrf.mxu0
    %v482 = vadd.f32 %v276, %v481
    %v483 = vpop.f32.mrf.mxu0
    %v484 = vadd.f32 %v280, %v483
    %485 = vdwg.mxu0
    %v486 = vmax.f32 %v478, 0.0
    %v487 = vmax.f32 %v480, 0.0
    %v488 = vmax.f32 %v482, 0.0
    %v489 = vmax.f32 %v484, 0.0
    %v490 = vpack.c.bf16 %v488, %v486
    %v491 = vpack.c.bf16 %v489, %v487
    %v492 = vld [vmem:[#allocation6] sm:$0xf]
    %v493 = vld [vmem:[#allocation6 + $0x4] sm:$0xf]
    %v494 = vld [vmem:[#allocation6 + $0x8] sm:$0xf]
    %v495 = vld [vmem:[#allocation6 + $0xc] sm:$0xf]
    %v496 = vld [vmem:[#allocation6 + $0x10] sm:$0xf]
    %v497 = vld [vmem:[#allocation6 + $0x14] sm:$0xf]
    %v498 = vld [vmem:[#allocation6 + $0x18] sm:$0xf]
    %v499 = vld [vmem:[#allocation6 + $0x1c] sm:$0xf]
    %v500 = vld [vmem:[#allocation6 + $0x20] sm:$0xf]
    %v501 = vld [vmem:[#allocation6 + $0x24] sm:$0xf]
    %v502 = vld [vmem:[#allocation6 + $0x28] sm:$0xf]
    %v503 = vld [vmem:[#allocation6 + $0x2c] sm:$0xf]
    %v504 = vld [vmem:[#allocation6 + $0x30] sm:$0xf]
    %v505 = vld [vmem:[#allocation6 + $0x34] sm:$0xf]
    %v506 = vld [vmem:[#allocation6 + $0x38] sm:$0xf]
    %v507 = vld [vmem:[#allocation6 + $0x3c] sm:$0xf]
    %v508 = vld [vmem:[#allocation6 + $0x40] sm:$0xf]
    %v509 = vld [vmem:[#allocation6 + $0x44] sm:$0xf]
    %v510 = vld [vmem:[#allocation6 + $0x48] sm:$0xf]
    %v511 = vld [vmem:[#allocation6 + $0x4c] sm:$0xf]
    %v512 = vld [vmem:[#allocation6 + $0x50] sm:$0xf]
    %v513 = vld [vmem:[#allocation6 + $0x54] sm:$0xf]
    %v514 = vld [vmem:[#allocation6 + $0x58] sm:$0xf]
    %v515 = vld [vmem:[#allocation6 + $0x5c] sm:$0xf]
    %v516 = vld [vmem:[#allocation6 + $0x60] sm:$0xf]
    %v517 = vld [vmem:[#allocation6 + $0x64] sm:$0xf]
    %v518 = vld [vmem:[#allocation6 + $0x68] sm:$0xf]
    %v519 = vld [vmem:[#allocation6 + $0x6c] sm:$0xf]
    %v520 = vld [vmem:[#allocation6 + $0x70] sm:$0xf]
    %v521 = vld [vmem:[#allocation6 + $0x74] sm:$0xf]
    %v522 = vld [vmem:[#allocation6 + $0x78] sm:$0xf]
    %v523 = vld [vmem:[#allocation6 + $0x7c] sm:$0xf]
    %v524 = vld [vmem:[%s6] sm:$0x1]
    %v526 = vlaneseq
    %v527 = vshrl.u32 %v526, 7
    %v528 = vsub.s32 0, %v527
    %v529 = vrot.slane %v524, %v528
    %v563 = vunpack.c.l.b16 %v492
    %v564 = vunpack.c.l.b16 %v493
    %v565 = vunpack.c.l.b16 %v494
    %v566 = vunpack.c.l.b16 %v495
    %v567 = vunpack.c.l.b16 %v496
    %v568 = vunpack.c.l.b16 %v497
    %v569 = vunpack.c.l.b16 %v498
    %v570 = vunpack.c.l.b16 %v499
    %v571 = vunpack.c.l.b16 %v500
    %v572 = vunpack.c.l.b16 %v501
    %v573 = vunpack.c.l.b16 %v502
    %v574 = vunpack.c.l.b16 %v503
    %v575 = vunpack.c.l.b16 %v504
    %v576 = vunpack.c.l.b16 %v505
    %v577 = vunpack.c.l.b16 %v506
    %v578 = vunpack.c.l.b16 %v507
    %v579 = vunpack.c.l.b16 %v508
    %v580 = vunpack.c.l.b16 %v509
    %v581 = vunpack.c.l.b16 %v510
    %v582 = vunpack.c.l.b16 %v511
    %v583 = vunpack.c.l.b16 %v512
    %v584 = vunpack.c.l.b16 %v513
    %v585 = vunpack.c.l.b16 %v514
    %v586 = vunpack.c.l.b16 %v515
    %v587 = vunpack.c.l.b16 %v516
    %v588 = vunpack.c.l.b16 %v517
    %v589 = vunpack.c.l.b16 %v518
    %v590 = vunpack.c.l.b16 %v519
    %v591 = vunpack.c.l.b16 %v520
    %v592 = vunpack.c.l.b16 %v521
    %v593 = vunpack.c.l.b16 %v522
    %v594 = vunpack.c.l.b16 %v523
    %v595 = vpack.c.b16 %v564, %v563
    %v596 = vpack.c.b16 %v566, %v565
    %v597 = vpack.c.b16 %v568, %v567
    %v598 = vpack.c.b16 %v570, %v569
    %v599 = vpack.c.b16 %v572, %v571
    %v600 = vpack.c.b16 %v574, %v573
    %v601 = vpack.c.b16 %v576, %v575
    %v602 = vpack.c.b16 %v578, %v577
    %v603 = vpack.c.b16 %v580, %v579
    %v604 = vpack.c.b16 %v582, %v581
    %v605 = vpack.c.b16 %v584, %v583
    %v606 = vpack.c.b16 %v586, %v585
    %v607 = vpack.c.b16 %v588, %v587
    %v608 = vpack.c.b16 %v590, %v589
    %v609 = vpack.c.b16 %v592, %v591
    %v610 = vpack.c.b16 %v594, %v593
    %627 = vmatprep.subr.bf16.mxu0 0
    %628 = vmatpush1.bf16.msra.mxu0 %v602
    %629 = vmatprep.subr.bf16.mxu0 0
    %630 = vmatpush1.bf16.msra.mxu0 %v601
    %631 = vmatprep.subr.bf16.mxu0 0
    %632 = vmatpush1.bf16.msra.mxu0 %v600
    %633 = vmatprep.subr.bf16.mxu0 0
    %634 = vmatpush1.bf16.msra.mxu0 %v599
    %635 = vmatprep.subr.bf16.mxu0 0
    %636 = vmatpush1.bf16.msra.mxu0 %v598
    %637 = vmatprep.subr.bf16.mxu0 0
    %638 = vmatpush1.bf16.msra.mxu0 %v597
    %639 = vmatprep.subr.bf16.mxu0 0
    %640 = vmatpush1.bf16.msra.mxu0 %v596
    %641 = vmatprep.subr.bf16.mxu0 0
    %642 = vmatpush1.bf16.msra.mxu0 %v595
    %643 = vmatprep.subr.bf16.mxu0 0
    %644 = vmatpush2.bf16.msra.mxu0 %v610
    %645 = vmatprep.subr.bf16.mxu0 0
    %646 = vmatpush2.bf16.msra.mxu0 %v609
    %647 = vmatprep.subr.bf16.mxu0 0
    %648 = vmatpush2.bf16.msra.mxu0 %v608
    %649 = vmatprep.subr.bf16.mxu0 0
    %650 = vmatpush2.bf16.msra.mxu0 %v607
    %651 = vmatprep.subr.bf16.mxu0 0
    %652 = vmatpush2.bf16.msra.mxu0 %v606
    %653 = vmatprep.subr.bf16.mxu0 0
    %654 = vmatpush2.bf16.msra.mxu0 %v605
    %655 = vmatprep.subr.bf16.mxu0 0
    %656 = vmatpush2.bf16.msra.mxu0 %v604
    %657 = vmatprep.subr.bf16.mxu0 0
    %658 = vmatpush2.bf16.msra.mxu0 %v603
    %659 = vmatprep.mubr.bf16.mxu0 %v491
    %660 = vmatmul.mubr.bf16.gmra.mxu0 %v490
    %v661 = vpop.f32.mrf.mxu0
    %v662 = vadd.f32 %v529, %v661
    %v663 = vpop.f32.mrf.mxu0
    %v664 = vpop.f32.mrf.mxu0
    %v665 = vadd.f32 %v529, %v664
    %v666 = vpop.f32.mrf.mxu0
    %667 = vdwg.mxu0
    %v668 = vld [vmem:[%s7] sm:$0x1]
    %v669 = vtanh.pop %v662
    %v670 = vtanh.pop %v665
    %v672 = vlaneseq
    %v673 = vshrl.u32 %v672, 7
    %v674 = vsub.s32 0, %v673
    %v675 = vrot.slane %v668, %v674
    %v677 = vmul.f32 %v675, %v669
    %v678 = vmul.f32 %v675, %v670
    %v679 = vld [vmem:[%s8] sm:$0x1]
    %v681 = vlaneseq
    %v682 = vshrl.u32 %v681, 7
    %v683 = vsub.s32 0, %v682
    %v684 = vrot.slane %v679, %v683
    %v686 = vadd.f32 %v677, %v684
    %v687 = vadd.f32 %v678, %v684
    %688 = vst [vmem:[%s9] sm:$0xff] %v686
    %689 = vst [vmem:[%s9 + $0x8] sm:$0xff] %v687
    // Predicated region
    $region50: #{actor_forward.1} parent=1 // pred_check
      _
    $region51: #{actor_forward.1} parent=1 // pred_check_branch
      %691 = sbr.rel (0) target = $region53
    $region52: #{actor_forward.1} parent=1 // pred_region
      _
    $region53: #{actor_forward.1} parent=1 // pred_fallthru
      _
    // Predicated region
    $region54: #{actor_forward.1} parent=1 // pred_check
      _
    $region55: #{actor_forward.1} parent=1 // pred_check_branch
      %693 = sbr.rel (0) target = $region57
    $region56: #{actor_forward.1} parent=1 // pred_region
      _
    $region57: #{actor_forward.1} parent=1 // pred_fallthru
      _
    %694 = vsyncpa [#allocation3], 1
    %695 = vsyncpa [#allocation5], 1

</llo_original>
